<compile_context>
chip_gen: v5e
topology: v5e:2x2
jax: 0.10.0
libtpu: 0.0.40
codegen_flags: <defaults>
</compile_context>

<pallas_src>
import jax
import jax.numpy as jnp
from jax.experimental import pallas as pl
from jax.experimental.pallas import tpu as pltpu


def _fused_linear_kernel(x_ref, w_ref, b_ref, out_ref):
    # (B, F) @ (F, P) + (1, P)  ->  (B, P), P is a multiple of 128 (lane-dense store).
    out_ref[...] = (
        jnp.dot(x_ref[...], w_ref[...], preferred_element_type=jnp.float32)
        + b_ref[...]
    ).astype(out_ref.dtype)


def _fused_linear(x, w_fused, b_fused):
    B = x.shape[0]
    P = w_fused.shape[1]
    return pl.pallas_call(
        _fused_linear_kernel,
        out_shape=jax.ShapeDtypeStruct((B, P), jnp.float32),
        in_specs=[
            pl.BlockSpec(memory_space=pltpu.MemorySpace.VMEM),  # x       (B, F)
            pl.BlockSpec(memory_space=pltpu.MemorySpace.VMEM),  # w_fused (F, P)
            pl.BlockSpec(memory_space=pltpu.MemorySpace.VMEM),  # b_fused (1, P)
        ],
        out_specs=pl.BlockSpec(memory_space=pltpu.MemorySpace.VMEM),
    )(x, w_fused, b_fused)


def make_privacy_classifier(w_fc, b_fc, w_dom, b_dom, lane_pad=128):
    """One-time parameter prep (transpose + concat + lane-pad), returns a jitted forward.

    w_fc: (C, F), b_fc: (C,), w_dom: (D, F), b_dom: (D,)  -- PyTorch Linear layout.
    """
    C, F = w_fc.shape
    D = w_dom.shape[0]
    n_out = C + D
    P = pl.cdiv(n_out, lane_pad) * lane_pad  # pad fused output axis to multiple of 128

    # Fused, pre-transposed, zero-padded weight (F, P) and bias (1, P). Done once.
    w_fused = jnp.zeros((F, P), jnp.float32)
    w_fused = w_fused.at[:, :C].set(w_fc.T.astype(jnp.float32))
    w_fused = w_fused.at[:, C:C + D].set(w_dom.T.astype(jnp.float32))
    b_fused = jnp.zeros((1, P), jnp.float32)
    b_fused = b_fused.at[0, :C].set(b_fc.astype(jnp.float32))
    b_fused = b_fused.at[0, C:C + D].set(b_dom.astype(jnp.float32))

    @jax.jit
    def forward(x, alpha=0.5):
        # ReverseLayerF.forward is identity; alpha only affects backward.
        del alpha
        out = _fused_linear(x, w_fused, b_fused)          # (B, P), lane-dense
        return out[:, :C], out[:, C:C + D]                # class_output, domain_output

    return forward


if __name__ == "__main__":
    # Small shapes consistent with the module: feature_dim=32, num_classes=4, num_domains=2.
    B, FEAT, NCLS, NDOM = 8, 32, 4, 2

    key = jax.random.PRNGKey(0)
    kx, kwf, kbf, kwd, kbd = jax.random.split(key, 5)

    x = jax.random.normal(kx, (B, FEAT), dtype=jnp.float32)
    # Deterministic parameter init (PyTorch-Linear-like scale 1/sqrt(fan_in)).
    bound = 1.0 / jnp.sqrt(FEAT)
    w_fc = jax.random.uniform(kwf, (NCLS, FEAT), jnp.float32, -bound, bound)
    b_fc = jax.random.uniform(kbf, (NCLS,), jnp.float32, -bound, bound)
    w_dom = jax.random.uniform(kwd, (NDOM, FEAT), jnp.float32, -bound, bound)
    b_dom = jax.random.uniform(kbd, (NDOM,), jnp.float32, -bound, bound)

    privacy_classifier = make_privacy_classifier(w_fc, b_fc, w_dom, b_dom)

    cls_out, dom_out = privacy_classifier(x, alpha=0.5)
    jax.block_until_ready((cls_out, dom_out))

    # Reference check (plain JAX).
    ref_cls = x @ w_fc.T + b_fc
    ref_dom = x @ w_dom.T + b_dom
    assert cls_out.shape == (B, NCLS) and dom_out.shape == (B, NDOM)
    assert jnp.allclose(cls_out, ref_cls, atol=1e-5, rtol=1e-5)
    assert jnp.allclose(dom_out, ref_dom, atol=1e-5, rtol=1e-5)

    print("KERNEL_OK")
</pallas_src>

<mosaic_0001>
module attributes {stable_mosaic.version = 11 : i64} {
  func.func @_fused_linear_kernel(%arg0: memref<8x32xf32, #tpu.memory_space<vmem>>, %arg1: memref<32x128xf32, #tpu.memory_space<vmem>>, %arg2: memref<1x128xf32, #tpu.memory_space<vmem>>, %arg3: memref<8x128xf32, #tpu.memory_space<vmem>>) attributes {dimension_semantics = [], scalar_prefetch = 0 : i64, scratch_operands = 0 : i64, tpu.core_type = #tpu.core_type<tc>} {
    %c0 = arith.constant 0 : index
    %c0_0 = arith.constant 0 : index
    %0 = vector.load %arg0[%c0, %c0_0] : memref<8x32xf32, #tpu.memory_space<vmem>>, vector<8x32xf32>
    %c0_1 = arith.constant 0 : index
    %c0_2 = arith.constant 0 : index
    %1 = vector.load %arg1[%c0_1, %c0_2] : memref<32x128xf32, #tpu.memory_space<vmem>>, vector<32x128xf32>
    %cst = arith.constant dense<0.000000e+00> : vector<8x128xf32>
    %2 = tpu.matmul %0, %1, %cst {dimension_numbers = #tpu.dot_dimension_numbers<[1], [0], [0], [1], [0, 0, 1, 1], [], []>} : vector<8x32xf32>, vector<32x128xf32>, vector<8x128xf32> -> vector<8x128xf32>
    %c0_3 = arith.constant 0 : index
    %c0_4 = arith.constant 0 : index
    %3 = vector.load %arg2[%c0_3, %c0_4] : memref<1x128xf32, #tpu.memory_space<vmem>>, vector<1x128xf32>
    %4 = vector.broadcast %3 : vector<1x128xf32> to vector<8x128xf32>
    %5 = arith.addf %2, %4 : vector<8x128xf32>
    %c0_5 = arith.constant 0 : index
    %c0_6 = arith.constant 0 : index
    %6 = vector.load %arg3[%c0_5, %c0_6] : memref<8x128xf32, #tpu.memory_space<vmem>>, vector<8x128xf32>
    tpu.vector_store %arg3[%c0_5, %c0_6], %5 {strides = array<i32>} : memref<8x128xf32, #tpu.memory_space<vmem>>, vector<8x128xf32>,
    return
  }
}

</mosaic_0001>

<llo_original>
// kernel: forward.1
$region0: #{forward.1}
  #allocation0 [shape = 'u32[]', space=smem, size = 0x4, offset = 0x4, fixed_abs, tag = 'smem constant byte address 0x4 - core index']
  #allocation1 [shape = 'u32[72,128]{1,0:T(1,128)}', space=vmem, size = 0x9000, scoped, tag = 'internal scratch']
  %s0 = inlined_call_operand.hbm [shape: f32[8,32], index: 0, kind: input, shape index: {}]
  %s1 = inlined_call_operand.hbm [shape: f32[32,128], index: 1, kind: input, shape index: {}]
  %s2 = inlined_call_operand.hbm [shape: f32[1,128], index: 2, kind: input, shape index: {}]
  %s3 = inlined_call_operand.vmem [shape: f32[8,128], index: 3, kind: output, shape index: {}]
  %s4 = sld [smem:[#allocation0]]
  $region34: #{forward.1} parent=0
    _
  %s6 = ssub.s32 1, %s4
  %s7 = scalar_select 0, %s6, %s4
  $region1: #{forward.1} parent=0
    #allocation2 [shape = 'u8[4096]{0}', space=vmem, size = 0x1000, scoped, tag = 'input window, operand 0, single buffered']
    #allocation3 [shape = 's32[1]{0}', space=sflag, size = 0x4, scoped, tag = 'scoped memory for forward.1']
    #allocation4 [shape = 'u8[16384]{0}', space=vmem, size = 0x4000, scoped, tag = 'input window, operand 1, single buffered']
    #allocation5 [shape = 's32[1]{0}', space=sflag, size = 0x4, scoped, tag = 'scoped memory for forward.1']
    #allocation6 [shape = 'u8[512]{0}', space=vmem, size = 0x400, scoped, tag = 'input window, operand 2, single buffered']
    %8 = vsyncpa [#allocation3], 0
    %9 = vsyncpa [#allocation5], 0
    // Predicated region
    $region2: #{forward.1} parent=1 // pred_check
      _
    $region3: #{forward.1} parent=1 // pred_check_branch
      %11 = sbr.rel (0) target = $region5
    $region4: #{forward.1} parent=1 // pred_region
      %13 = vsyncadd [#allocation3], 0
      %s15 = sshll.u32 %s0, 4
      %s16 = int_to_ptr.hbm [resolvable:$true] %s15
      %s17 = sshll.u32 [#allocation2], 4
      %s18 = int_to_ptr.vmem [resolvable:$true] %s17
      %20 = dma.hbm_to_vmem [thread:$0]  %s16, 128, %s18, [#allocation3]
    $region5: #{forward.1} parent=1 // pred_fallthru
      _
    // Predicated region
    $region6: #{forward.1} parent=1 // pred_check
      _
    $region7: #{forward.1} parent=1 // pred_check_branch
      %22 = sbr.rel (0) target = $region9
    $region8: #{forward.1} parent=1 // pred_region
      %24 = vsyncadd [#allocation5], 0
      %s25 = sshll.u32 %s1, 4
      %s26 = int_to_ptr.hbm [resolvable:$true] %s25
      %s27 = sshll.u32 [#allocation4], 4
      %s28 = int_to_ptr.vmem [resolvable:$true] %s27
      %33 = dma.hbm_to_vmem [thread:$0]  %s26, 512, %s28, [#allocation5], 128, 128, 8
    $region9: #{forward.1} parent=1 // pred_fallthru
      _
    // Predicated region
    $region10: #{forward.1} parent=1 // pred_check
      _
    $region11: #{forward.1} parent=1 // pred_check_branch
      %35 = sbr.rel (0) target = $region13
    $region12: #{forward.1} parent=1 // pred_region
      %37 = vsyncadd [#allocation5], 0
      %s39 = sshll.u32 %s2, 4
      %s40 = int_to_ptr.hbm [resolvable:$true] %s39
      %s41 = sshll.u32 [#allocation6], 4
      %s42 = int_to_ptr.vmem [resolvable:$true] %s41
      %44 = dma.hbm_to_vmem [thread:$0]  %s40, 16, %s42, [#allocation5]
    $region13: #{forward.1} parent=1 // pred_fallthru
      _
    // Predicated region
    $region14: #{forward.1} parent=1 // pred_check
      _
    $region15: #{forward.1} parent=1 // pred_check_branch
      %46 = sbr.rel (0) target = $region17
    $region16: #{forward.1} parent=1 // pred_region
      %48 = dma.done [#allocation3], 128
    $region17: #{forward.1} parent=1 // pred_fallthru
      _
    // Predicated region
    $region18: #{forward.1} parent=1 // pred_check
      _
    $region19: #{forward.1} parent=1 // pred_check_branch
      %50 = sbr.rel (0) target = $region21
    $region20: #{forward.1} parent=1 // pred_region
      %52 = dma.done [#allocation5], 512
    $region21: #{forward.1} parent=1 // pred_fallthru
      _
    // Predicated region
    $region22: #{forward.1} parent=1 // pred_check
      _
    $region23: #{forward.1} parent=1 // pred_check_branch
      %54 = sbr.rel (0) target = $region25
    $region24: #{forward.1} parent=1 // pred_region
      %56 = dma.done [#allocation5], 16
    $region25: #{forward.1} parent=1 // pred_fallthru
      _
    %v57 = vld [vmem:[#allocation2] sm:$0xff]
    %v58 = vld [vmem:[#allocation4] sm:$0xff]
    %v59 = vld [vmem:[#allocation4 + $0x8] sm:$0xff]
    %v60 = vld [vmem:[#allocation4 + $0x10] sm:$0xff]
    %v61 = vld [vmem:[#allocation4 + $0x18] sm:$0xff]
    %v62 = vld [vmem:[#allocation6] sm:$0x1]
    %v64 = vperm.slane %v62, 0
    %vm66 = vcmask 261120
    %v68 = vsel %vm66, %v57, 0
    %70 = vmatpush.msra.mxu0 0.0
    %71 = vmatpush.msra.mxu0 0.0
    %72 = vmatpush.msra.mxu0 0.0
    %73 = vmatpush.msra.mxu0 0.0
    %74 = vmatpush.msra.mxu0 0.0
    %75 = vmatpush.msra.mxu0 0.0
    %76 = vmatpush.msra.mxu0 0.0
    %77 = vmatpush.msra.mxu0 0.0
    %78 = vmatpush.msra.mxu0 0.0
    %79 = vmatpush.msra.mxu0 0.0
    %80 = vmatpush.msra.mxu0 0.0
    %81 = vmatpush.msra.mxu0 0.0
    %82 = vmatpush.msra.mxu0 %v61
    %83 = vmatpush.msra.mxu0 %v60
    %84 = vmatpush.msra.mxu0 %v59
    %85 = vmatpush.msra.mxu0 %v58
    %86 = vmatmul.f32.gmra.mxu0 %v68
    %v87 = vpop.f32.mrf.mxu0
    %v88 = vadd.f32 %v64, %v87
    %89 = vdwg.mxu0
    %90 = vst [vmem:[%s3] sm:$0xff] %v88
    // Predicated region
    $region26: #{forward.1} parent=1 // pred_check
      _
    $region27: #{forward.1} parent=1 // pred_check_branch
      %92 = sbr.rel (0) target = $region29
    $region28: #{forward.1} parent=1 // pred_region
      _
    $region29: #{forward.1} parent=1 // pred_fallthru
      _
    // Predicated region
    $region30: #{forward.1} parent=1 // pred_check
      _
    $region31: #{forward.1} parent=1 // pred_check_branch
      %94 = sbr.rel (0) target = $region33
    $region32: #{forward.1} parent=1 // pred_region
      _
    $region33: #{forward.1} parent=1 // pred_fallthru
      _
    %95 = vsyncpa [#allocation3], 1
    %96 = vsyncpa [#allocation5], 1

</llo_original>
